<compile_context>
chip_gen: v6e
topology: v6e:2x2x1
jax: 0.10.0
libtpu: 0.0.40
codegen_flags: <defaults>
</compile_context>

<pallas_src>
import functools

import jax
import jax.numpy as jnp
from jax import lax
from jax.experimental import pallas as pl
from jax.experimental.pallas import tpu as pltpu


def _round_up(x, m):
    return (x + m - 1) // m * m


def _next_pow2(x):
    return 1 << max(0, (x - 1).bit_length())


def _vmem_limit_bytes():
    """Per-generation VMEM budget: 3/4 of physical VMEM (96 MiB on v5e/v6e's 128 MiB,
    48 MiB on v7x's 64 MiB). Falls back to the v7x-safe figure if the query fails."""
    cap = 64 * 1024 * 1024
    try:
        cap = int(pltpu.get_tpu_info().vmem_capacity_bytes)
    except Exception:
        pass
    return (cap // 4) * 3


def _channel_layout(c):
    """Lane-dense layout: C<=128 -> pad channels to the next power of two (divides
    128) and pack 128//c_pad points per 128-lane row; C>128 -> pad to a multiple of
    128 with one point per row. Returns (c_pad, pack, lanes)."""
    if c <= 128:
        c_pad = _next_pow2(c)
        return c_pad, 128 // c_pad, 128
    c_pad = _round_up(c, 128)
    return c_pad, 1, c_pad


def _pick_tile_rows(rows, lanes, itemsize, vmem_limit, max_tile_rows):
    """Tile rows so 2x double-buffered input + 2x output fit in the VMEM budget."""
    budget = max(vmem_limit - (4 << 20), 4 << 20)     # slack for scratch / internals
    cap = budget // (4 * lanes * itemsize)
    if max_tile_rows is not None:
        cap = min(cap, max_tile_rows)
    cap = max(8, (cap // 8) * 8)
    return min(cap, rows)                              # rows is a multiple of 8


def _bn_fused_kernel(x_ref, gamma_ref, beta_ref, out_ref,
                     sum8_ref, sumsq8_ref, scale_ref, shift_ref,
                     *, n_valid, eps, c_pad, lanes, rows, tile_rows):
    """grid = (phase, tile): phase 0 accumulates per-lane sum / sumsq into VMEM
    scratch; its last step folds them into per-channel scale/shift; phase 1 applies
    y = x * scale + shift."""
    p = pl.program_id(0)          # 0 = statistics pass, 1 = normalize pass
    i = pl.program_id(1)          # tile index along the packed point axis
    n_tiles = pl.num_programs(1)
    tail = rows % tile_rows       # static: valid rows of the (partial) last tile

    @pl.when(jnp.logical_and(p == 0, i == 0))
    def _init():
        sum8_ref[...] = jnp.zeros_like(sum8_ref)
        sumsq8_ref[...] = jnp.zeros_like(sumsq8_ref)

    def _accumulate(mask_tail):
        x = x_ref[...].astype(jnp.float32)
        if mask_tail:
            # The out-of-bounds rows of a partial last block hold stale VMEM data;
            # zero them so they cannot pollute the statistics.
            row_ids = lax.broadcasted_iota(jnp.int32, (tile_rows, lanes), 0)
            x = jnp.where(row_ids < tail, x, 0.0)
        # Fold 8 rows at a time with plain VPU adds into a full-sublane accumulator;
        # the cross-sublane / cross-lane-group reduce happens once, in the epilogue.
        xr = x.reshape(tile_rows // 8, 8, lanes)
        sum8_ref[...] += jnp.sum(xr, axis=0)
        sumsq8_ref[...] += jnp.sum(xr * xr, axis=0)

    if tail == 0:
        @pl.when(p == 0)
        def _():
            _accumulate(False)
    else:
        @pl.when(jnp.logical_and(p == 0, i < n_tiles - 1))
        def _():
            _accumulate(False)

        @pl.when(jnp.logical_and(p == 0, i == n_tiles - 1))
        def _():
            _accumulate(True)

    @pl.when(jnp.logical_and(p == 0, i == n_tiles - 1))
    def _finalize_stats():
        s8 = sum8_ref[...]
        ss8 = sumsq8_ref[...]
        # Fold the `pack` lane-groups (each group of c_pad lanes holds one packed
        # point's channels) into per-channel totals replicated onto every lane via
        # cyclic XLU rolls (pack is a power of two and pack * c_pad == lanes).
        shift_amt = c_pad
        while shift_amt < lanes:
            s8 = s8 + pltpu.roll(s8, shift_amt, axis=1)
            ss8 = ss8 + pltpu.roll(ss8, shift_amt, axis=1)
            shift_amt *= 2
        csum = jnp.sum(s8, axis=0, keepdims=True)
        csumsq = jnp.sum(ss8, axis=0, keepdims=True)
        inv_n = 1.0 / n_valid
        mean = csum * inv_n
        var = jnp.maximum(csumsq * inv_n - mean * mean, 0.0)   # biased, clamped
        scale = gamma_ref[...] * lax.rsqrt(var + eps)
        scale_ref[...] = scale
        shift_ref[...] = beta_ref[...] - mean * scale

    @pl.when(p == 1)
    def _normalize():
        x = x_ref[...].astype(jnp.float32)
        out_ref[...] = (x * scale_ref[...] + shift_ref[...]).astype(out_ref.dtype)


def batch_norm_1d_pallas(features, gamma, beta, *, eps=1e-5, max_tile_rows=None):
    """BatchNorm1d (training statistics) over [N, C] features via one fused Pallas kernel."""
    n, c = features.shape
    dtype = features.dtype
    c_pad, pack, lanes = _channel_layout(c)

    # Pad only what the lane-packed view strictly requires: channels up to c_pad and
    # points up to a multiple of 8*pack. When N and C are already aligned this is a
    # no-op (no extra HBM pass); the reshape below is a free contiguous view.
    n_pad = _round_up(n, 8 * pack)
    x = features
    if n_pad != n or c_pad != c:
        x = jnp.pad(x, ((0, n_pad - n), (0, c_pad - c)))
    rows = (n_pad * c_pad) // lanes            # multiple of 8 by construction
    x = x.reshape(rows, lanes)

    vmem_limit = _vmem_limit_bytes()
    itemsize = jnp.dtype(dtype).itemsize
    tile_rows = _pick_tile_rows(rows, lanes, itemsize, vmem_limit, max_tile_rows)
    n_tiles = -(-rows // tile_rows)            # last tile may be partial (masked)

    gamma_t = jnp.tile(jnp.pad(gamma.astype(jnp.float32), (0, c_pad - c)), pack)
    beta_t = jnp.tile(jnp.pad(beta.astype(jnp.float32), (0, c_pad - c)), pack)
    gamma_t = gamma_t.reshape(1, lanes)
    beta_t = beta_t.reshape(1, lanes)

    kernel = functools.partial(
        _bn_fused_kernel, n_valid=float(n), eps=float(eps), c_pad=c_pad,
        lanes=lanes, rows=rows, tile_rows=tile_rows)

    out = pl.pallas_call(
        kernel,
        out_shape=jax.ShapeDtypeStruct((rows, lanes), dtype),
        grid_spec=pltpu.PrefetchScalarGridSpec(
            num_scalar_prefetch=0,
            grid=(2, n_tiles),   # (phase, tile); tile axis fastest
            in_specs=[
                pl.BlockSpec((tile_rows, lanes), lambda p, i: (i, 0)),
                pl.BlockSpec((1, lanes), lambda p, i: (0, 0)),
                pl.BlockSpec((1, lanes), lambda p, i: (0, 0)),
            ],
            # Output block index is pinned to 0 for all of phase 0, so the (still
            # uninitialized) output buffer is never flushed during the stats pass;
            # the first flush happens at the phase-1 i=0 -> i=1 transition, after
            # block 0 has been written. Do not reorder the grid or change this map
            # without re-checking that invariant.
            out_specs=pl.BlockSpec((tile_rows, lanes), lambda p, i: (p * i, 0)),
            scratch_shapes=[
                pltpu.VMEM((8, lanes), jnp.float32),   # per-sublane sum accumulator
                pltpu.VMEM((8, lanes), jnp.float32),   # per-sublane sum-of-squares
                pltpu.VMEM((1, lanes), jnp.float32),   # scale = gamma * rsqrt(var+eps)
                pltpu.VMEM((1, lanes), jnp.float32),   # shift = beta - mean * scale
            ]),
        compiler_params=pltpu.CompilerParams(
            # Phase 1 consumes statistics accumulated across all phase-0 tiles, so
            # both axes must run sequentially on one core.
            dimension_semantics=("arbitrary", "arbitrary"),
            vmem_limit_bytes=int(vmem_limit)),
    )(x, gamma_t, beta_t)

    out = out.reshape(n_pad, c_pad)
    if n_pad != n or c_pad != c:
        out = out[:n, :c]
    return out


def sparse_dynamic_batch_norm_forward(feats, coords, stride, params, *, eps=1e-5,
                                      max_tile_rows=None):
    """Mirrors SparseDynamicBatchNorm.forward:
       - slice weight/bias to the runtime feature_dim (dynamic channel count),
       - batch-norm the features, pass coordinates / stride through unchanged."""
    feature_dim = feats.shape[-1]
    gamma = params["weight"][:feature_dim]   # bn.weight[:feature_dim]
    beta = params["bias"][:feature_dim]      # bn.bias[:feature_dim]
    out_feats = batch_norm_1d_pallas(feats, gamma, beta, eps=eps,
                                     max_tile_rows=max_tile_rows)
    # SparseTensor(output_features, inputs.C, inputs.s) — plain pass-through.
    return out_feats, coords, stride


if __name__ == "__main__":
    key = jax.random.PRNGKey(0)
    k_f, k_c, k_w, k_b, k_f2, k_f3, k_f4 = jax.random.split(key, 7)

    eps = 1e-5

    def reference(feats, gamma, beta):
        f = feats.astype(jnp.float32)
        mean = f.mean(axis=0, keepdims=True)
        var = f.var(axis=0, keepdims=True)          # biased, like BN training mode
        return (f - mean) / jnp.sqrt(var + eps) * gamma + beta

    # --- Case A: lane-packed (C=32 -> 4 points/row), ragged N, multi-tile + masked tail. ---
    c_max, feature_dim, n_points = 64, 32, 1034
    params = {
        "weight": 1.0 + 0.1 * jax.random.normal(k_w, (c_max,), jnp.float32),
        "bias": 0.1 * jax.random.normal(k_b, (c_max,), jnp.float32),
    }
    feats = jax.random.normal(k_f, (n_points, feature_dim), jnp.float32) * 2.0 + 0.5
    coords = jax.random.randint(k_c, (n_points, 4), 0, 64, jnp.int32)
    gamma = params["weight"][:feature_dim]
    beta = params["bias"][:feature_dim]

    out_feats, out_coords, out_stride = sparse_dynamic_batch_norm_forward(
        feats, coords, 1, params, eps=eps, max_tile_rows=64)   # force several tiles
    out_feats = jax.block_until_ready(out_feats)

    ref = reference(feats, gamma, beta)
    assert out_feats.shape == (n_points, feature_dim)
    assert jnp.allclose(out_feats, ref, atol=1e-3, rtol=1e-3)
    assert bool(jnp.all(out_coords == coords))
    assert out_stride == 1

    # --- Case B: C=48 channel-padded to 64 (pack=2), single resident tile (x read once). ---
    n_b, c_b = 300, 48
    feats_b = jax.random.normal(k_f2, (n_b, c_b), jnp.float32) - 1.5
    gamma_b = jnp.linspace(0.5, 1.5, c_b, dtype=jnp.float32)
    beta_b = jnp.linspace(-0.2, 0.2, c_b, dtype=jnp.float32)
    out_b = jax.block_until_ready(
        batch_norm_1d_pallas(feats_b, gamma_b, beta_b, eps=eps))
    assert out_b.shape == (n_b, c_b)
    assert jnp.allclose(out_b, reference(feats_b, gamma_b, beta_b),
                        atol=1e-3, rtol=1e-3)

    # --- Case C: bf16 features in / bf16 out (f32 accumulation), multi-tile with tail. ---
    n_c_, c_c = 512, 64
    feats_c = (jax.random.normal(k_f3, (n_c_, c_c), jnp.float32) * 3.0
               ).astype(jnp.bfloat16)
    gamma_c = jnp.ones((c_c,), jnp.float32)
    beta_c = jnp.zeros((c_c,), jnp.float32)
    out_c = jax.block_until_ready(
        batch_norm_1d_pallas(feats_c, gamma_c, beta_c, eps=eps, max_tile_rows=96))
    assert out_c.dtype == jnp.bfloat16
    assert jnp.allclose(out_c.astype(jnp.float32), reference(feats_c, gamma_c, beta_c),
                        atol=5e-2, rtol=5e-2)

    # --- Case D: C > 128 (160 -> 256 lanes, pack=1), small ragged N, single tile. ---
    n_d, c_d = 120, 160
    feats_d = jax.random.normal(k_f4, (n_d, c_d), jnp.float32) * 0.7 + 0.3
    gamma_d = jnp.linspace(0.8, 1.2, c_d, dtype=jnp.float32)
    beta_d = jnp.linspace(-0.1, 0.1, c_d, dtype=jnp.float32)
    out_d = jax.block_until_ready(
        batch_norm_1d_pallas(feats_d, gamma_d, beta_d, eps=eps))
    assert out_d.shape == (n_d, c_d)
    assert jnp.allclose(out_d, reference(feats_d, gamma_d, beta_d),
                        atol=1e-3, rtol=1e-3)

    print("KERNEL_OK")
</pallas_src>

<mosaic_0001>
module attributes {stable_mosaic.version = 11 : i64} {
  func.func @_bn_fused_kernel(%arg0: i32, %arg1: i32, %arg2: memref<64x128xf32, #tpu.memory_space<vmem>>, %arg3: memref<1x128xf32, #tpu.memory_space<vmem>>, %arg4: memref<1x128xf32, #tpu.memory_space<vmem>>, %arg5: memref<64x128xf32, #tpu.memory_space<vmem>>, %arg6: memref<8x128xf32, #tpu.memory_space<vmem>>, %arg7: memref<8x128xf32, #tpu.memory_space<vmem>>, %arg8: memref<1x128xf32, #tpu.memory_space<vmem>>, %arg9: memref<1x128xf32, #tpu.memory_space<vmem>>) attributes {dimension_semantics = [#tpu.dimension_semantics<arbitrary>, #tpu.dimension_semantics<arbitrary>], iteration_bounds = array<i64: 2, 5>, scalar_prefetch = 0 : i64, scratch_operands = 4 : i64, tpu.core_type = #tpu.core_type<tc>, window_params = [{transform_indices = @transform_0, window_bounds = array<i64: 64, 128>}, {pipeline_mode = #tpu.pipeline_mode<synchronous>, transform_indices = @transform_1, window_bounds = array<i64: 1, 128>}, {pipeline_mode = #tpu.pipeline_mode<synchronous>, transform_indices = @transform_2, window_bounds = array<i64: 1, 128>}, {transform_indices = @transform_3, window_bounds = array<i64: 64, 128>}]} {
    %c0_i32 = arith.constant 0 : i32
    %0 = arith.cmpi eq, %arg0, %c0_i32 : i32
    %c0_i32_0 = arith.constant 0 : i32
    %1 = arith.cmpi eq, %arg1, %c0_i32_0 : i32
    %2 = arith.andi %0, %1 : i1
    %3 = arith.extui %2 : i1 to i32
    %c0_i32_1 = arith.constant 0 : i32
    %4 = arith.cmpi ne, %3, %c0_i32_1 : i32
    scf.if %4 {
      %cst = arith.constant 0.000000e+00 : f32
      %23 = vector.broadcast %cst : f32 to vector<8x128xf32>
      %c0 = arith.constant 0 : index
      %c0_11 = arith.constant 0 : index
      %24 = vector.load %arg6[%c0, %c0_11] : memref<8x128xf32, #tpu.memory_space<vmem>>, vector<8x128xf32>
      tpu.vector_store %arg6[%c0, %c0_11], %23 {strides = array<i32>} : memref<8x128xf32, #tpu.memory_space<vmem>>, vector<8x128xf32>,
      %cst_12 = arith.constant 0.000000e+00 : f32
      %25 = vector.broadcast %cst_12 : f32 to vector<8x128xf32>
      %c0_13 = arith.constant 0 : index
      %c0_14 = arith.constant 0 : index
      %26 = vector.load %arg7[%c0_13, %c0_14] : memref<8x128xf32, #tpu.memory_space<vmem>>, vector<8x128xf32>
      tpu.vector_store %arg7[%c0_13, %c0_14], %25 {strides = array<i32>} : memref<8x128xf32, #tpu.memory_space<vmem>>, vector<8x128xf32>,
    } else {
    }
    %c0_i32_2 = arith.constant 0 : i32
    %5 = arith.cmpi eq, %arg0, %c0_i32_2 : i32
    %c4_i32 = arith.constant 4 : i32
    %6 = arith.cmpi slt, %arg1, %c4_i32 : i32
    %7 = arith.andi %5, %6 : i1
    %8 = arith.extui %7 : i1 to i32
    %c0_i32_3 = arith.constant 0 : i32
    %9 = arith.cmpi ne, %8, %c0_i32_3 : i32
    scf.if %9 {
      %c0 = arith.constant 0 : index
      %c0_11 = arith.constant 0 : index
      %23 = vector.load %arg2[%c0, %c0_11] : memref<64x128xf32, #tpu.memory_space<vmem>>, vector<64x128xf32>
      %24 = vector.shape_cast %23 : vector<64x128xf32> to vector<8x8x128xf32>
      %c0_12 = arith.constant 0 : index
      %c0_13 = arith.constant 0 : index
      %25 = vector.load %arg6[%c0_12, %c0_13] : memref<8x128xf32, #tpu.memory_space<vmem>>, vector<8x128xf32>
      %cst = arith.constant dense<0.000000e+00> : vector<8x128xf32>
      %26 = vector.multi_reduction <add>, %24, %cst [0] : vector<8x8x128xf32> to vector<8x128xf32>
      %27 = arith.addf %25, %26 : vector<8x128xf32>
      %c0_14 = arith.constant 0 : index
      %c0_15 = arith.constant 0 : index
      %28 = vector.load %arg6[%c0_14, %c0_15] : memref<8x128xf32, #tpu.memory_space<vmem>>, vector<8x128xf32>
      tpu.vector_store %arg6[%c0_14, %c0_15], %27 {strides = array<i32>} : memref<8x128xf32, #tpu.memory_space<vmem>>, vector<8x128xf32>,
      %c0_16 = arith.constant 0 : index
      %c0_17 = arith.constant 0 : index
      %29 = vector.load %arg7[%c0_16, %c0_17] : memref<8x128xf32, #tpu.memory_space<vmem>>, vector<8x128xf32>
      %30 = arith.mulf %24, %24 : vector<8x8x128xf32>
      %cst_18 = arith.constant dense<0.000000e+00> : vector<8x128xf32>
      %31 = vector.multi_reduction <add>, %30, %cst_18 [0] : vector<8x8x128xf32> to vector<8x128xf32>
      %32 = arith.addf %29, %31 : vector<8x128xf32>
      %c0_19 = arith.constant 0 : index
      %c0_20 = arith.constant 0 : index
      %33 = vector.load %arg7[%c0_19, %c0_20] : memref<8x128xf32, #tpu.memory_space<vmem>>, vector<8x128xf32>
      tpu.vector_store %arg7[%c0_19, %c0_20], %32 {strides = array<i32>} : memref<8x128xf32, #tpu.memory_space<vmem>>, vector<8x128xf32>,
    } else {
    }
    %c0_i32_4 = arith.constant 0 : i32
    %10 = arith.cmpi eq, %arg0, %c0_i32_4 : i32
    %c4_i32_5 = arith.constant 4 : i32
    %11 = arith.cmpi eq, %arg1, %c4_i32_5 : i32
    %12 = arith.andi %10, %11 : i1
    %13 = arith.extui %12 : i1 to i32
    %c0_i32_6 = arith.constant 0 : i32
    %14 = arith.cmpi ne, %13, %c0_i32_6 : i32
    scf.if %14 {
      %c0 = arith.constant 0 : index
      %c0_11 = arith.constant 0 : index
      %23 = vector.load %arg2[%c0, %c0_11] : memref<64x128xf32, #tpu.memory_space<vmem>>, vector<64x128xf32>
      %24 = tpu.iota {dimensions = array<i32: 0>} : vector<64x128xi32>
      %c8_i32 = arith.constant 8 : i32
      %25 = vector.broadcast %c8_i32 : i32 to vector<64x128xi32>
      %26 = arith.cmpi slt, %24, %25 : vector<64x128xi32>
      %cst = arith.constant 0.000000e+00 : f32
      %27 = vector.broadcast %cst : f32 to vector<64x128xf32>
      %28 = arith.select %26, %23, %27 : vector<64x128xi1>, vector<64x128xf32>
      %29 = vector.shape_cast %28 : vector<64x128xf32> to vector<8x8x128xf32>
      %c0_12 = arith.constant 0 : index
      %c0_13 = arith.constant 0 : index
      %30 = vector.load %arg6[%c0_12, %c0_13] : memref<8x128xf32, #tpu.memory_space<vmem>>, vector<8x128xf32>
      %cst_14 = arith.constant dense<0.000000e+00> : vector<8x128xf32>
      %31 = vector.multi_reduction <add>, %29, %cst_14 [0] : vector<8x8x128xf32> to vector<8x128xf32>
      %32 = arith.addf %30, %31 : vector<8x128xf32>
      %c0_15 = arith.constant 0 : index
      %c0_16 = arith.constant 0 : index
      %33 = vector.load %arg6[%c0_15, %c0_16] : memref<8x128xf32, #tpu.memory_space<vmem>>, vector<8x128xf32>
      tpu.vector_store %arg6[%c0_15, %c0_16], %32 {strides = array<i32>} : memref<8x128xf32, #tpu.memory_space<vmem>>, vector<8x128xf32>,
      %c0_17 = arith.constant 0 : index
      %c0_18 = arith.constant 0 : index
      %34 = vector.load %arg7[%c0_17, %c0_18] : memref<8x128xf32, #tpu.memory_space<vmem>>, vector<8x128xf32>
      %35 = arith.mulf %29, %29 : vector<8x8x128xf32>
      %cst_19 = arith.constant dense<0.000000e+00> : vector<8x128xf32>
      %36 = vector.multi_reduction <add>, %35, %cst_19 [0] : vector<8x8x128xf32> to vector<8x128xf32>
      %37 = arith.addf %34, %36 : vector<8x128xf32>
      %c0_20 = arith.constant 0 : index
      %c0_21 = arith.constant 0 : index
      %38 = vector.load %arg7[%c0_20, %c0_21] : memref<8x128xf32, #tpu.memory_space<vmem>>, vector<8x128xf32>
      tpu.vector_store %arg7[%c0_20, %c0_21], %37 {strides = array<i32>} : memref<8x128xf32, #tpu.memory_space<vmem>>, vector<8x128xf32>,
    } else {
    }
    %c0_i32_7 = arith.constant 0 : i32
    %15 = arith.cmpi eq, %arg0, %c0_i32_7 : i32
    %c4_i32_8 = arith.constant 4 : i32
    %16 = arith.cmpi eq, %arg1, %c4_i32_8 : i32
    %17 = arith.andi %15, %16 : i1
    %18 = arith.extui %17 : i1 to i32
    %c0_i32_9 = arith.constant 0 : i32
    %19 = arith.cmpi ne, %18, %c0_i32_9 : i32
    scf.if %19 {
      %c0 = arith.constant 0 : index
      %c0_11 = arith.constant 0 : index
      %23 = vector.load %arg6[%c0, %c0_11] : memref<8x128xf32, #tpu.memory_space<vmem>>, vector<8x128xf32>
      %c0_12 = arith.constant 0 : index
      %c0_13 = arith.constant 0 : index
      %24 = vector.load %arg7[%c0_12, %c0_13] : memref<8x128xf32, #tpu.memory_space<vmem>>, vector<8x128xf32>
      %c32_i32 = arith.constant 32 : i32
      %25 = tpu.dynamic_rotate %23 by %c32_i32 dim 1 : vector<8x128xf32>, i32 -> vector<8x128xf32>
      %26 = arith.addf %23, %25 : vector<8x128xf32>
      %c32_i32_14 = arith.constant 32 : i32
      %27 = tpu.dynamic_rotate %24 by %c32_i32_14 dim 1 : vector<8x128xf32>, i32 -> vector<8x128xf32>
      %28 = arith.addf %24, %27 : vector<8x128xf32>
      %c64_i32 = arith.constant 64 : i32
      %29 = tpu.dynamic_rotate %26 by %c64_i32 dim 1 : vector<8x128xf32>, i32 -> vector<8x128xf32>
      %30 = arith.addf %26, %29 : vector<8x128xf32>
      %c64_i32_15 = arith.constant 64 : i32
      %31 = tpu.dynamic_rotate %28 by %c64_i32_15 dim 1 : vector<8x128xf32>, i32 -> vector<8x128xf32>
      %32 = arith.addf %28, %31 : vector<8x128xf32>
      %cst = arith.constant dense<0.000000e+00> : vector<128xf32>
      %33 = vector.multi_reduction <add>, %30, %cst [0] : vector<8x128xf32> to vector<128xf32>
      %34 = vector.shape_cast %33 : vector<128xf32> to vector<1x128xf32>
      %cst_16 = arith.constant dense<0.000000e+00> : vector<128xf32>
      %35 = vector.multi_reduction <add>, %32, %cst_16 [0] : vector<8x128xf32> to vector<128xf32>
      %36 = vector.shape_cast %35 : vector<128xf32> to vector<1x128xf32>
      %cst_17 = arith.constant 9.671180e-04 : f32
      %37 = vector.broadcast %cst_17 : f32 to vector<1x128xf32>
      %38 = arith.mulf %34, %37 : vector<1x128xf32>
      %cst_18 = arith.constant 9.671180e-04 : f32
      %39 = vector.broadcast %cst_18 : f32 to vector<1x128xf32>
      %40 = arith.mulf %36, %39 : vector<1x128xf32>
      %41 = arith.mulf %38, %38 : vector<1x128xf32>
      %42 = arith.subf %40, %41 : vector<1x128xf32>
      %cst_19 = arith.constant 0.000000e+00 : f32
      %43 = vector.broadcast %cst_19 : f32 to vector<1x128xf32>
      %44 = arith.maximumf %42, %43 : vector<1x128xf32>
      %c0_20 = arith.constant 0 : index
      %c0_21 = arith.constant 0 : index
      %45 = vector.load %arg3[%c0_20, %c0_21] : memref<1x128xf32, #tpu.memory_space<vmem>>, vector<1x128xf32>
      %cst_22 = arith.constant 9.99999974E-6 : f32
      %46 = vector.broadcast %cst_22 : f32 to vector<1x128xf32>
      %47 = arith.addf %44, %46 : vector<1x128xf32>
      %48 = math.rsqrt %47 : vector<1x128xf32>
      %49 = arith.mulf %45, %48 : vector<1x128xf32>
      %c0_23 = arith.constant 0 : index
      %c0_24 = arith.constant 0 : index
      %50 = vector.load %arg8[%c0_23, %c0_24] : memref<1x128xf32, #tpu.memory_space<vmem>>, vector<1x128xf32>
      tpu.vector_store %arg8[%c0_23, %c0_24], %49 {strides = array<i32>} : memref<1x128xf32, #tpu.memory_space<vmem>>, vector<1x128xf32>,
      %c0_25 = arith.constant 0 : index
      %c0_26 = arith.constant 0 : index
      %51 = vector.load %arg4[%c0_25, %c0_26] : memref<1x128xf32, #tpu.memory_space<vmem>>, vector<1x128xf32>
      %52 = arith.mulf %38, %49 : vector<1x128xf32>
      %53 = arith.subf %51, %52 : vector<1x128xf32>
      %c0_27 = arith.constant 0 : index
      %c0_28 = arith.constant 0 : index
      %54 = vector.load %arg9[%c0_27, %c0_28] : memref<1x128xf32, #tpu.memory_space<vmem>>, vector<1x128xf32>
      tpu.vector_store %arg9[%c0_27, %c0_28], %53 {strides = array<i32>} : memref<1x128xf32, #tpu.memory_space<vmem>>, vector<1x128xf32>,
    } else {
    }
    %c1_i32 = arith.constant 1 : i32
    %20 = arith.cmpi eq, %arg0, %c1_i32 : i32
    %21 = arith.extui %20 : i1 to i32
    %c0_i32_10 = arith.constant 0 : i32
    %22 = arith.cmpi ne, %21, %c0_i32_10 : i32
    scf.if %22 {
      %c0 = arith.constant 0 : index
      %c0_11 = arith.constant 0 : index
      %23 = vector.load %arg2[%c0, %c0_11] : memref<64x128xf32, #tpu.memory_space<vmem>>, vector<64x128xf32>
      %c0_12 = arith.constant 0 : index
      %c0_13 = arith.constant 0 : index
      %24 = vector.load %arg8[%c0_12, %c0_13] : memref<1x128xf32, #tpu.memory_space<vmem>>, vector<1x128xf32>
      %25 = vector.broadcast %24 : vector<1x128xf32> to vector<64x128xf32>
      %26 = arith.mulf %23, %25 : vector<64x128xf32>
      %c0_14 = arith.constant 0 : index
      %c0_15 = arith.constant 0 : index
      %27 = vector.load %arg9[%c0_14, %c0_15] : memref<1x128xf32, #tpu.memory_space<vmem>>, vector<1x128xf32>
      %28 = vector.broadcast %27 : vector<1x128xf32> to vector<64x128xf32>
      %29 = arith.addf %26, %28 : vector<64x128xf32>
      %c0_16 = arith.constant 0 : index
      %c0_17 = arith.constant 0 : index
      %30 = vector.load %arg5[%c0_16, %c0_17] : memref<64x128xf32, #tpu.memory_space<vmem>>, vector<64x128xf32>
      tpu.vector_store %arg5[%c0_16, %c0_17], %29 {strides = array<i32>} : memref<64x128xf32, #tpu.memory_space<vmem>>, vector<64x128xf32>,
    } else {
    }
    return
  }
  func.func @transform_0(%arg0: i32, %arg1: i32) -> (i32, i32) {
    %c0_i32 = arith.constant 0 : i32
    %c0_i32_0 = arith.constant 0 : i32
    return %arg1, %c0_i32 : i32, i32
  }
  func.func @transform_1(%arg0: i32, %arg1: i32) -> (i32, i32) {
    %c0_i32 = arith.constant 0 : i32
    %c0_i32_0 = arith.constant 0 : i32
    %c0_i32_1 = arith.constant 0 : i32
    return %c0_i32, %c0_i32_0 : i32, i32
  }
  func.func @transform_2(%arg0: i32, %arg1: i32) -> (i32, i32) {
    %c0_i32 = arith.constant 0 : i32
    %c0_i32_0 = arith.constant 0 : i32
    %c0_i32_1 = arith.constant 0 : i32
    return %c0_i32, %c0_i32_0 : i32, i32
  }
  func.func @transform_3(%arg0: i32, %arg1: i32) -> (i32, i32) {
    %0 = arith.muli %arg0, %arg1 : i32
    %c0_i32 = arith.constant 0 : i32
    %c0_i32_0 = arith.constant 0 : i32
    return %0, %c0_i32 : i32, i32
  }
}

</mosaic_0001>

<llo_original>
// kernel: tpu_custom_call.1
$region0: #{tpu_custom_call.1}
  #allocation0 [shape = 'u32[]', space=smem, size = 0x4, offset = 0x4, fixed_abs, tag = 'smem constant byte address 0x4 - core index']
  #allocation1 [shape = 'u32[144,128]{1,0:T(1,128)}', space=vmem, size = 0x12000, scoped, tag = 'internal scratch']
  #allocation2 [shape = 'f32[8,128]{1,0:T(8,128)}', space=vmem, size = 0x1000, scoped, tag = 'scratch operand']
  #allocation3 [shape = 'f32[8,128]{1,0:T(8,128)}', space=vmem, size = 0x1000, scoped, tag = 'scratch operand']
  #allocation4 [shape = 'f32[1,128]{1,0:T(1,128)}', space=vmem, size = 0x200, scoped, tag = 'scratch operand']
  #allocation5 [shape = 'f32[1,128]{1,0:T(1,128)}', space=vmem, size = 0x200, scoped, tag = 'scratch operand']
  %s0 = inlined_call_operand.hbm [shape: f32[264,128], index: 0, kind: input, shape index: {}]
  %s1 = inlined_call_operand.vmem [shape: f32[1,128], index: 1, kind: input, shape index: {}]
  %s2 = inlined_call_operand.vmem [shape: f32[1,128], index: 2, kind: input, shape index: {}]
  %s3 = inlined_call_operand.hbm [shape: f32[264,128], index: 3, kind: output, shape index: {}]
  %s4 = sld [smem:[#allocation0]]
  $region65: #{tpu_custom_call.1} parent=0
    _
  %s6 = ssub.s32 1, %s4
  %s7 = scalar_select 0, %s6, %s4
  $region1: #{tpu_custom_call.1} parent=0
    #allocation6 [shape = 'u8[65536]{0}', space=vmem, size = 0x10000, scoped, tag = 'input window, operand 0']
    #allocation7 [shape = 's32[2]{0}', space=sflag, size = 0x8, scoped, tag = 'scoped memory for tpu_custom_call.1']
    #allocation8 [shape = 's32[2]{0}', space=sflag, size = 0x8, scoped, tag = 'scoped memory for tpu_custom_call.1']
    #allocation9 [shape = 'u8[65536]{0}', space=vmem, size = 0x10000, scoped, tag = 'output window, operand 0']
    %8 = vsyncpa [#allocation7], 0
    %s9 = scalar_lea.sflag [#allocation7], 1
    %10 = vsyncpa %s9, 0
    %11 = vsyncpa [#allocation8], 0
    %s12 = scalar_lea.sflag [#allocation8], 1
    %13 = vsyncpa %s12, 0
    loop: start=0, step=1, limit=12
    $region2: #{tpu_custom_call.1} parent=1 // loop_pre_header
      _
    $region3: #{tpu_custom_call.1} parent=1 // loop_header
      %s15 = sphi 0, %s19
      %p16 = scmp.ge.s32.totalorder %s15, 12
      %s22 = sphi 0, %s34
      %s23 = sphi 0, %s30
      %s24 = sphi 0, %s22
      %s25 = sphi 0, %s23
      %s26 = sphi 0, %s24
      %s27 = sphi 0, %s25
      %s37 = sphi 0, %s39
      %s40 = sphi 0, %s37
      %s41 = sphi 0, %s40
      %s57 = sphi 0, %s41
      %s61 = sphi 0, %s61
      %s63 = sphi 0, %s61
      %s64 = sphi 0, %s63
      %s78 = sphi 0, %s64
      %s82 = sphi 0, %s82
      %s84 = sphi 0, %s82
      %s85 = sphi 0, %s84
      %s99 = sphi 0, %s85
      %s107 = sphi 0, %s109
      %s110 = sphi 0, %s107
      %s111 = sphi 0, %s110
      %s127 = sphi 0, %s111
    $region4: #{tpu_custom_call.1} parent=1 // loop_header_branch
      %18 = sbr.rel (%p16) target = $region8
    $region5: #{tpu_custom_call.1} parent=1 // loop_body
      %s20 = ssub.s32 %s15, 1
      %s21 = ssub.s32 %s15, 2
      %s28 = sadd.s32 1, %s23
      %p29 = scmp.ge.s32.totalorder %s28, 5
      %s30 = scalar_select %p29, 0, %s28
      %s31 = sadd.s32 1, %s22
      %s32 = scalar_select %p29, %s31, %s22
      %p33 = scmp.ge.s32.totalorder %s32, 2
      %s34 = scalar_select %p33, 0, %s32
      %s35 = ssub.s32 %s23, %s30
      %p36 = scmp.eq.s32.totalorder %s35, 0
      %s38 = sadd.s32 %s37, 1
      %s39 = scalar_select %p36, %s37, %s38
      %p42 = pneg %p36
      %p43 = scmp.eq.s32.totalorder %s15, 9
      %p44 = por %p42, %p43
      %p45 = scmp.ne.s32.totalorder %s37, %s40
      %p46 = scmp.eq.s32.totalorder %s15, 0
      %p47 = por %p45, %p46
      %p48 = scmp.ne.s32.totalorder %s37, %s40
      %p49 = scmp.eq.s32.totalorder %s20, 9
      %p50 = por %p48, %p49
      %p51 = scmp.ne.s32.totalorder %s40, %s41
      %p52 = scmp.eq.s32.totalorder %s20, 0
      %p53 = por %p51, %p52
      %p54 = scmp.ne.s32.totalorder %s40, %s41
      %p55 = scmp.eq.s32.totalorder %s21, 9
      %p56 = por %p54, %p55
      %p58 = scmp.ne.s32.totalorder %s41, %s57
      %p59 = scmp.eq.s32.totalorder %s21, 0
      %p60 = por %p58, %p59
      %s62 = sadd.s32 %s61, 1
      %p65 = scmp.eq.s32.totalorder %s15, 9
      %p66 = scmp.ne.s32.totalorder %s61, %s63
      %p67 = scmp.eq.s32.totalorder %s15, 0
      %p68 = por %p66, %p67
      %p69 = scmp.ne.s32.totalorder %s61, %s63
      %p70 = scmp.eq.s32.totalorder %s20, 9
      %p71 = por %p69, %p70
      %p72 = scmp.ne.s32.totalorder %s63, %s64
      %p73 = scmp.eq.s32.totalorder %s20, 0
      %p74 = por %p72, %p73
      %p75 = scmp.ne.s32.totalorder %s63, %s64
      %p76 = scmp.eq.s32.totalorder %s21, 9
      %p77 = por %p75, %p76
      %p79 = scmp.ne.s32.totalorder %s64, %s78
      %p80 = scmp.eq.s32.totalorder %s21, 0
      %p81 = por %p79, %p80
      %s83 = sadd.s32 %s82, 1
      %p86 = scmp.eq.s32.totalorder %s15, 9
      %p87 = scmp.ne.s32.totalorder %s82, %s84
      %p88 = scmp.eq.s32.totalorder %s15, 0
      %p89 = por %p87, %p88
      %p90 = scmp.ne.s32.totalorder %s82, %s84
      %p91 = scmp.eq.s32.totalorder %s20, 9
      %p92 = por %p90, %p91
      %p93 = scmp.ne.s32.totalorder %s84, %s85
      %p94 = scmp.eq.s32.totalorder %s20, 0
      %p95 = por %p93, %p94
      %p96 = scmp.ne.s32.totalorder %s84, %s85
      %p97 = scmp.eq.s32.totalorder %s21, 9
      %p98 = por %p96, %p97
      %p100 = scmp.ne.s32.totalorder %s85, %s99
      %p101 = scmp.eq.s32.totalorder %s21, 0
      %p102 = por %p100, %p101
      %s103 = smul.u32 %s22, %s23
      %s104 = smul.u32 %s34, %s30
      %s105 = ssub.s32 %s103, %s104
      %p106 = scmp.eq.s32.totalorder %s105, 0
      %s108 = sadd.s32 %s107, 1
      %s109 = scalar_select %p106, %s107, %s108
      %p112 = pneg %p106
      %p113 = scmp.eq.s32.totalorder %s15, 9
      %p114 = por %p112, %p113
      %p115 = scmp.ne.s32.totalorder %s107, %s110
      %p116 = scmp.eq.s32.totalorder %s15, 0
      %p117 = por %p115, %p116
      %p118 = scmp.ne.s32.totalorder %s107, %s110
      %p119 = scmp.eq.s32.totalorder %s20, 9
      %p120 = por %p118, %p119
      %p121 = scmp.ne.s32.totalorder %s110, %s111
      %p122 = scmp.eq.s32.totalorder %s20, 0
      %p123 = por %p121, %p122
      %p124 = scmp.ne.s32.totalorder %s110, %s111
      %p125 = scmp.eq.s32.totalorder %s21, 9
      %p126 = por %p124, %p125
      %p128 = scmp.ne.s32.totalorder %s111, %s127
      %p129 = scmp.eq.s32.totalorder %s21, 0
      %p130 = por %p128, %p129
      %p131 = scmp.le.s32.totalorder 1, %s15
      %p132 = scmp.lt.s32.totalorder %s15, 11
      %p133 = pnand %p131, %p132
      %p134 = pneg %p133
      // Predicated region
      $region9: #{tpu_custom_call.1} parent=5 // pred_check
        _
      $region10: #{tpu_custom_call.1} parent=5 // pred_check_branch
        %136 = sbr.rel (%p133) target = $region12
      $region11: #{tpu_custom_call.1} parent=5 // pred_region
        %s137 = ssub.s32 %s15, 1
        // Predicated region
        $region13: #{tpu_custom_call.1} parent=11 // pred_check
          %p138 = pneg %p74
        $region14: #{tpu_custom_call.1} parent=11 // pred_check_branch
          %140 = sbr.rel (%p138) target = $region16
        $region15: #{tpu_custom_call.1} parent=11 // pred_region
          _
        $region16: #{tpu_custom_call.1} parent=11 // pred_fallthru
          _
        // Predicated region
        $region17: #{tpu_custom_call.1} parent=11 // pred_check
          %p141 = pneg %p95
        $region18: #{tpu_custom_call.1} parent=11 // pred_check_branch
          %143 = sbr.rel (%p141) target = $region20
        $region19: #{tpu_custom_call.1} parent=11 // pred_region
          _
        $region20: #{tpu_custom_call.1} parent=11 // pred_fallthru
          _
      $region12: #{tpu_custom_call.1} parent=5 // pred_fallthru
        _
      %p144 = scmp.lt.s32.totalorder %s15, 10
      // Predicated region
      $region21: #{tpu_custom_call.1} parent=5 // pred_check
        %p145 = pneg %p144
      $region22: #{tpu_custom_call.1} parent=5 // pred_check_branch
        %147 = sbr.rel (%p145) target = $region24
      $region23: #{tpu_custom_call.1} parent=5 // pred_region
        // Predicated region
        $region25: #{tpu_custom_call.1} parent=23 // pred_check
          %p148 = pneg %p47
        $region26: #{tpu_custom_call.1} parent=23 // pred_check_branch
          %150 = sbr.rel (%p148) target = $region28
        $region27: #{tpu_custom_call.1} parent=23 // pred_region
          %s151 = sand.u32 %s37, 1
          %s152 = scalar_lea.sflag [#allocation7], %s151
          %s153 = sand.u32 %s37, 1
          %s154 = smul.addr %s153, 64
          %s155 = scalar_lea.vmem [#allocation6], %s154
          %s156 = smul.u32 8, %s23
          %s157 = ssub.s32 33, %s156
          %p158 = scmp.lt.s32.totalorder %s157, 8
          %s159 = scalar_select %p158, %s157, 8
          %s160 = smul.u32 128, %s159
          %s162 = ssub.s32 1024, %s160
          %163 = vsyncadd %s152, %s162
          %p164 = scmp.ne.s32.totalorder 0, %s160
          %s165 = smul.addr %s156, 128
          %s166 = scalar_lea.hbm %s0, %s165
          %s167 = smul.u32 8, %s159
          %s168 = sshll.u32 %s155, 4
          %s169 = int_to_ptr.vmem [resolvable:$true] %s168
          %s170 = sshll.u32 %s167, 4
          %174 = dma.hbm_to_vmem [thread:$0]  (%p164), %s166, %s170, %s169, %s152, 128, 128, 8
        $region28: #{tpu_custom_call.1} parent=23 // pred_fallthru
          _
      $region24: #{tpu_custom_call.1} parent=5 // pred_fallthru
        _
      %p175 = scmp.le.s32.totalorder 1, %s15
      %p176 = scmp.lt.s32.totalorder %s15, 11
      %p177 = pnand %p175, %p176
      %p178 = pneg %p177
      // Predicated region
      $region29: #{tpu_custom_call.1} parent=5 // pred_check
        _
      $region30: #{tpu_custom_call.1} parent=5 // pred_check_branch
        %180 = sbr.rel (%p177) target = $region32
      $region31: #{tpu_custom_call.1} parent=5 // pred_region
        %s181 = ssub.s32 %s15, 1
        %s182 = sand.u32 %s40, 1
        %s183 = scalar_lea.sflag [#allocation7], %s182
        %s184 = sand.u32 %s40, 1
        %s185 = smul.addr %s184, 64
        %s186 = scalar_lea.vmem [#allocation6], %s185
        // Predicated region
        $region33: #{tpu_custom_call.1} parent=31 // pred_check
          %p187 = pneg %p53
        $region34: #{tpu_custom_call.1} parent=31 // pred_check_branch
          %189 = sbr.rel (%p187) target = $region36
        $region35: #{tpu_custom_call.1} parent=31 // pred_region
          %190 = dma.done %s183, 1024
        $region36: #{tpu_custom_call.1} parent=31 // pred_fallthru
          _
        %s191 = sand.u32 %s40, 1
        %s192 = scalar_lea.sflag [#allocation7], %s191
        %s193 = sand.u32 %s40, 1
        %s194 = smul.addr %s193, 64
        %s195 = scalar_lea.vmem [#allocation6], %s194
        %p196 = pneg %p53
        %p197 = pneg %p50
        %p198 = pneg %p74
        %p199 = pneg %p71
        %p200 = pneg %p95
        %p201 = pneg %p92
        %p202 = pneg %p123
        %p203 = pneg %p120
        %s204 = sand.u32 %s110, 1
        %s205 = scalar_lea.sflag [#allocation8], %s204
        %s206 = sand.u32 %s110, 1
        %s207 = smul.addr %s206, 64
        %s208 = scalar_lea.vmem [#allocation9], %s207
        %s209 = smul.u32 8, %s25
        %s210 = ssub.s32 33, %s209
        %p211 = scmp.lt.s32.totalorder %s210, 8
        %s212 = scalar_select %p211, %s210, 8
        %s213 = smul.u32 128, %s212
        %s214 = smul.u32 %s24, %s25
        %s215 = smul.u32 8, %s214
        %s216 = ssub.s32 33, %s215
        %p217 = scmp.lt.s32.totalorder %s216, 8
        %s218 = scalar_select %p217, %s216, 8
        %s219 = smul.u32 128, %s218
        %p220 = scmp.eq.s32.totalorder %s24, 0
        %p221 = scmp.eq.s32.totalorder %s25, 0
        %p222 = pnand %p220, %p221
        %p223 = pneg %p222
        // Predicated region
        $region37: #{tpu_custom_call.1} parent=31 // pred_check
          _
        $region38: #{tpu_custom_call.1} parent=31 // pred_check_branch
          %225 = sbr.rel (%p222) target = $region40
        $region39: #{tpu_custom_call.1} parent=31 // pred_region
          %226 = vst [vmem:[#allocation2] sm:$0xff] 0.0
          %227 = vst [vmem:[#allocation3] sm:$0xff] 0.0
        $region40: #{tpu_custom_call.1} parent=31 // pred_fallthru
          _
        %p228 = scmp.lt.s32.totalorder %s25, 4
        %p229 = pnand %p220, %p228
        %p230 = pneg %p229
        // Predicated region
        $region41: #{tpu_custom_call.1} parent=31 // pred_check
          _
        $region42: #{tpu_custom_call.1} parent=31 // pred_check_branch
          %232 = sbr.rel (%p229) target = $region44
        $region43: #{tpu_custom_call.1} parent=31 // pred_region
          %v233 = vld [vmem:[%s186] sm:$0xff]
          %v234 = vld [vmem:[%s186 + $0x8] sm:$0xff]
          %v235 = vld [vmem:[%s186 + $0x10] sm:$0xff]
          %v236 = vld [vmem:[%s186 + $0x18] sm:$0xff]
          %v237 = vld [vmem:[%s186 + $0x20] sm:$0xff]
          %v238 = vld [vmem:[%s186 + $0x28] sm:$0xff]
          %v239 = vld [vmem:[%s186 + $0x30] sm:$0xff]
          %v240 = vld [vmem:[%s186 + $0x38] sm:$0xff]
          %v241 = vld [vmem:[#allocation2] sm:$0xff]
          %v242 = vadd.f32 %v233, %v234
          %v243 = vadd.f32 %v242, %v235
          %v244 = vadd.f32 %v243, %v236
          %v245 = vadd.f32 %v244, %v237
          %v246 = vadd.f32 %v245, %v238
          %v247 = vadd.f32 %v246, %v239
          %v248 = vadd.f32 %v247, %v240
          %v249 = vadd.f32 %v241, %v248
          %250 = vst [vmem:[#allocation2] sm:$0xff] %v249
          %v251 = vld [vmem:[#allocation3] sm:$0xff]
          %v252 = vmul.f32 %v233, %v233
          %v253 = vmul.f32 %v234, %v234
          %v254 = vmul.f32 %v235, %v235
          %v255 = vmul.f32 %v236, %v236
          %v256 = vmul.f32 %v237, %v237
          %v257 = vmul.f32 %v238, %v238
          %v258 = vmul.f32 %v239, %v239
          %v259 = vmul.f32 %v240, %v240
          %v260 = vadd.f32 %v252, %v253
          %v261 = vadd.f32 %v260, %v254
          %v262 = vadd.f32 %v261, %v255
          %v263 = vadd.f32 %v262, %v256
          %v264 = vadd.f32 %v263, %v257
          %v265 = vadd.f32 %v264, %v258
          %v266 = vadd.f32 %v265, %v259
          %v267 = vadd.f32 %v251, %v266
          %268 = vst [vmem:[#allocation3] sm:$0xff] %v267
        $region44: #{tpu_custom_call.1} parent=31 // pred_fallthru
          _
        %p269 = scmp.eq.s32.totalorder %s25, 4
        %p270 = pnand %p220, %p269
        %p271 = pneg %p270
        // Predicated region
        $region45: #{tpu_custom_call.1} parent=31 // pred_check
          _
        $region46: #{tpu_custom_call.1} parent=31 // pred_check_branch
          %273 = sbr.rel (%p270) target = $region48
        $region47: #{tpu_custom_call.1} parent=31 // pred_region
          %v274 = vld [vmem:[%s186] sm:$0xff]
          %v275 = vld [vmem:[%s186 + $0x8] sm:$0xff]
          %v276 = vld [vmem:[%s186 + $0x10] sm:$0xff]
          %v277 = vld [vmem:[%s186 + $0x18] sm:$0xff]
          %v278 = vld [vmem:[%s186 + $0x20] sm:$0xff]
          %v279 = vld [vmem:[%s186 + $0x28] sm:$0xff]
          %v280 = vld [vmem:[%s186 + $0x30] sm:$0xff]
          %v281 = vld [vmem:[%s186 + $0x38] sm:$0xff]
          %v282 = vlaneseq
          %v283 = vshrl.u32 %v282, 7
          %v284 = vadd.s32 %v283, 8
          %v285 = vadd.s32 %v283, 16
          %v286 = vadd.s32 %v283, 24
          %v287 = vadd.s32 %v283, 32
          %v288 = vadd.s32 %v283, 40
          %v289 = vadd.s32 %v283, 48
          %v290 = vadd.s32 %v283, 56
          %vm291 = vcmp.lt.s32.totalorder %v283, 8
          %vm292 = vcmp.lt.s32.totalorder %v284, 8
          %vm293 = vcmp.lt.s32.totalorder %v285, 8
          %vm294 = vcmp.lt.s32.totalorder %v286, 8
          %vm295 = vcmp.lt.s32.totalorder %v287, 8
          %vm296 = vcmp.lt.s32.totalorder %v288, 8
          %vm297 = vcmp.lt.s32.totalorder %v289, 8
          %vm298 = vcmp.lt.s32.totalorder %v290, 8
          %v299 = vsel %vm291, %v274, 0.0
          %v300 = vsel %vm292, %v275, 0.0
          %v301 = vsel %vm293, %v276, 0.0
          %v302 = vsel %vm294, %v277, 0.0
          %v303 = vsel %vm295, %v278, 0.0
          %v304 = vsel %vm296, %v279, 0.0
          %v305 = vsel %vm297, %v280, 0.0
          %v306 = vsel %vm298, %v281, 0.0
          %v307 = vld [vmem:[#allocation2] sm:$0xff]
          %v308 = vadd.f32 %v299, %v300
          %v309 = vadd.f32 %v308, %v301
          %v310 = vadd.f32 %v309, %v302
          %v311 = vadd.f32 %v310, %v303
          %v312 = vadd.f32 %v311, %v304
          %v313 = vadd.f32 %v312, %v305
          %v314 = vadd.f32 %v313, %v306
          %v315 = vadd.f32 %v307, %v314
          %316 = vst [vmem:[#allocation2] sm:$0xff] %v315
          %v317 = vld [vmem:[#allocation3] sm:$0xff]
          %v318 = vmul.f32 %v299, %v299
          %v319 = vmul.f32 %v300, %v300
          %v320 = vmul.f32 %v301, %v301
          %v321 = vmul.f32 %v302, %v302
          %v322 = vmul.f32 %v303, %v303
          %v323 = vmul.f32 %v304, %v304
          %v324 = vmul.f32 %v305, %v305
          %v325 = vmul.f32 %v306, %v306
          %v326 = vadd.f32 %v318, %v319
          %v327 = vadd.f32 %v326, %v320
          %v328 = vadd.f32 %v327, %v321
          %v329 = vadd.f32 %v328, %v322
          %v330 = vadd.f32 %v329, %v323
          %v331 = vadd.f32 %v330, %v324
          %v332 = vadd.f32 %v331, %v325
          %v333 = vadd.f32 %v317, %v332
          %334 = vst [vmem:[#allocation3] sm:$0xff] %v333
          %v335 = vld [vmem:[#allocation2] sm:$0xff]
          %v336 = vld [vmem:[#allocation3] sm:$0xff]
          %337 = vrot.lane.b32.xlu0 %v335, 32
          %v338 = vpop.permute.xlu0 %337
          %v339 = vadd.f32 %v335, %v338
          %340 = vrot.lane.b32.xlu0 %v336, 32
          %v341 = vpop.permute.xlu0 %340
          %v342 = vadd.f32 %v336, %v341
          %343 = vrot.lane.b32.xlu0 %v339, 64
          %v344 = vpop.permute.xlu0 %343
          %v345 = vadd.f32 %v339, %v344
          %346 = vrot.lane.b32.xlu0 %v342, 64
          %v347 = vpop.permute.xlu0 %346
          %v348 = vadd.f32 %v342, %v347
          %v349 = vrot.slane %v345, 4
          %v350 = vadd.f32 %v345, %v349
          %v351 = vrot.slane %v350, 2
          %v352 = vadd.f32 %v350, %v351
          %v353 = vrot.slane %v352, 1
          %v354 = vadd.f32 %v352, %v353
          %v355 = vrot.slane %v348, 4
          %v356 = vadd.f32 %v348, %v355
          %v357 = vrot.slane %v356, 2
          %v358 = vadd.f32 %v356, %v357
          %v359 = vrot.slane %v358, 1
          %v360 = vadd.f32 %v358, %v359
          %v361 = vmul.f32 %v354, 0.000967118
          %v362 = vmul.f32 %v360, 0.000967118
          %v363 = vmul.f32 %v361, %v361
          %v364 = vsub.f32 %v362, %v363
          %v365 = vmax.f32 %v364, 0.0
          %v366 = vld [vmem:[%s1] sm:$0x1]
          %v367 = vadd.f32 %v365, 1e-05
          %v368 = vrsqrt.pop %v367
          %v369 = vmul.f32 %v366, %v368
          %370 = vst [vmem:[#allocation4] sm:$0x1] %v369
          %v371 = vld [vmem:[%s2] sm:$0x1]
          %v372 = vmul.f32 %v361, %v369
          %v373 = vsub.f32 %v371, %v372
          %374 = vst [vmem:[#allocation5] sm:$0x1] %v373
        $region48: #{tpu_custom_call.1} parent=31 // pred_fallthru
          _
        %p375 = scmp.eq.s32.totalorder %s24, 1
        // Predicated region
        $region49: #{tpu_custom_call.1} parent=31 // pred_check
          %p376 = pneg %p375
        $region50: #{tpu_custom_call.1} parent=31 // pred_check_branch
          %378 = sbr.rel (%p376) target = $region52
        $region51: #{tpu_custom_call.1} parent=31 // pred_region
          %v379 = vld [vmem:[%s186] sm:$0xff]
          %v380 = vld [vmem:[%s186 + $0x8] sm:$0xff]
          %v381 = vld [vmem:[%s186 + $0x10] sm:$0xff]
          %v382 = vld [vmem:[%s186 + $0x18] sm:$0xff]
          %v383 = vld [vmem:[%s186 + $0x20] sm:$0xff]
          %v384 = vld [vmem:[%s186 + $0x28] sm:$0xff]
          %v385 = vld [vmem:[%s186 + $0x30] sm:$0xff]
          %v386 = vld [vmem:[%s186 + $0x38] sm:$0xff]
          %v387 = vld [vmem:[#allocation4] sm:$0x1]
          %v389 = vlaneseq
          %v390 = vshrl.u32 %v389, 7
          %v391 = vsub.s32 0, %v390
          %v392 = vrot.slane %v387, %v391
          %v394 = vmul.f32 %v379, %v392
          %v395 = vmul.f32 %v380, %v392
          %v396 = vmul.f32 %v381, %v392
          %v397 = vmul.f32 %v382, %v392
          %v398 = vmul.f32 %v383, %v392
          %v399 = vmul.f32 %v384, %v392
          %v400 = vmul.f32 %v385, %v392
          %v401 = vmul.f32 %v386, %v392
          %v402 = vld [vmem:[#allocation5] sm:$0x1]
          %v404 = vlaneseq
          %v405 = vshrl.u32 %v404, 7
          %v406 = vsub.s32 0, %v405
          %v407 = vrot.slane %v402, %v406
          %v409 = vadd.f32 %v394, %v407
          %v410 = vadd.f32 %v395, %v407
          %v411 = vadd.f32 %v396, %v407
          %v412 = vadd.f32 %v397, %v407
          %v413 = vadd.f32 %v398, %v407
          %v414 = vadd.f32 %v399, %v407
          %v415 = vadd.f32 %v400, %v407
          %v416 = vadd.f32 %v401, %v407
          %417 = vst [vmem:[%s208] sm:$0xff] %v409
          %418 = vst [vmem:[%s208 + $0x8] sm:$0xff] %v410
          %419 = vst [vmem:[%s208 + $0x10] sm:$0xff] %v411
          %420 = vst [vmem:[%s208 + $0x18] sm:$0xff] %v412
          %421 = vst [vmem:[%s208 + $0x20] sm:$0xff] %v413
          %422 = vst [vmem:[%s208 + $0x28] sm:$0xff] %v414
          %423 = vst [vmem:[%s208 + $0x30] sm:$0xff] %v415
          %424 = vst [vmem:[%s208 + $0x38] sm:$0xff] %v416
        $region52: #{tpu_custom_call.1} parent=31 // pred_fallthru
          _
        %s425 = sand.u32 %s110, 1
        %s426 = scalar_lea.sflag [#allocation8], %s425
        %s427 = sand.u32 %s110, 1
        %s428 = smul.addr %s427, 64
        %s429 = scalar_lea.vmem [#allocation9], %s428
        // Predicated region
        $region53: #{tpu_custom_call.1} parent=31 // pred_check
          %p430 = pneg %p120
        $region54: #{tpu_custom_call.1} parent=31 // pred_check_branch
          %432 = sbr.rel (%p430) target = $region56
        $region55: #{tpu_custom_call.1} parent=31 // pred_region
          %s433 = smul.u32 %s24, %s25
          %s434 = smul.u32 8, %s433
          %s435 = ssub.s32 33, %s434
          %p436 = scmp.lt.s32.totalorder %s435, 8
          %s437 = scalar_select %p436, %s435, 8
          %s438 = smul.u32 128, %s437
          %s440 = ssub.s32 1024, %s438
          %441 = vsyncadd %s426, %s440
          %p442 = scmp.ne.s32.totalorder 0, %s438
          %s443 = smul.addr %s434, 128
          %s444 = scalar_lea.hbm %s3, %s443
          %s445 = smul.u32 8, %s437
          %s446 = sshll.u32 %s429, 4
          %s447 = int_to_ptr.vmem [resolvable:$true] %s446
          %s448 = sshll.u32 %s445, 4
          %452 = dma.vmem_to_hbm [thread:$0]  (%p442), %s447, %s448, %s444, %s426, 128, 128, 8
        $region56: #{tpu_custom_call.1} parent=31 // pred_fallthru
          _
      $region32: #{tpu_custom_call.1} parent=5 // pred_fallthru
        _
      %p453 = scmp.le.s32.totalorder 2, %s15
      // Predicated region
      $region57: #{tpu_custom_call.1} parent=5 // pred_check
        %p454 = pneg %p453
      $region58: #{tpu_custom_call.1} parent=5 // pred_check_branch
        %456 = sbr.rel (%p454) target = $region60
      $region59: #{tpu_custom_call.1} parent=5 // pred_region
        %s457 = ssub.s32 %s15, 2
        // Predicated region
        $region61: #{tpu_custom_call.1} parent=59 // pred_check
          %p458 = pneg %p126
        $region62: #{tpu_custom_call.1} parent=59 // pred_check_branch
          %460 = sbr.rel (%p458) target = $region64
        $region63: #{tpu_custom_call.1} parent=59 // pred_region
          %s461 = sand.u32 %s111, 1
          %s462 = scalar_lea.sflag [#allocation8], %s461
          %s463 = sand.u32 %s111, 1
          %s464 = smul.addr %s463, 64
          %s465 = scalar_lea.vmem [#allocation9], %s464
          %466 = dma.done %s462, 1024
        $region64: #{tpu_custom_call.1} parent=59 // pred_fallthru
          _
      $region60: #{tpu_custom_call.1} parent=5 // pred_fallthru
        _
    $region6: #{tpu_custom_call.1} parent=1 // loop_footer
      %s19 = sadd.s32 1, %s15
    $region7: #{tpu_custom_call.1} parent=1 // loop_footer_branch
      %14 = sbr.rel target = $region3
    $region8: #{tpu_custom_call.1} parent=1 // loop_exit
      _
    %467 = vsyncpa [#allocation7], 1
    %s468 = scalar_lea.sflag [#allocation7], 1
    %469 = vsyncpa %s468, 1
    %470 = vsyncpa [#allocation8], 1
    %s471 = scalar_lea.sflag [#allocation8], 1
    %472 = vsyncpa %s471, 1

</llo_original>
